<compile_context>
chip_gen: v6e
topology: v6e:2x2x1
jax: 0.10.0
libtpu: 0.0.40
codegen_flags: <defaults>
</compile_context>

<pallas_src>
import jax
import jax.numpy as jnp
from jax.experimental import pallas as pl
from jax.experimental.pallas import tpu as pltpu


def _mean_pool_kernel(x_ref, m_ref, o_ref, acc_ref, den_ref):
    """Masked mean pooling over the sequence axis (S is chunked on grid axis 2).

    x_ref:   (TB, Sc, Hc) hidden-state tile, native dtype.
    m_ref:   (TB, 1,  Sc) attention-mask tile, float32, lane-dense.
    o_ref:   (TB, 1,  Hc) float32 output tile (written at the last S-chunk).
    acc_ref: (TB, 1,  Hc) float32 accumulator scratch.
    den_ref: (TB, 1,  1 ) float32 mask-sum scratch.
    """
    k = pl.program_id(2)

    @pl.when(k == 0)
    def _init():
        acc_ref[...] = jnp.zeros_like(acc_ref)
        den_ref[...] = jnp.zeros_like(den_ref)

    x = x_ref[...]                      # (TB, Sc, Hc) — stays in native dtype
    m = m_ref[...]                      # (TB, 1, Sc)  — float32

    # S-contraction on the MXU with f32 accumulation.  The mask is cast to
    # x's dtype (exact for 0/1 masks) so x is never upcast to a full-tile
    # f32 temporary and no x*m elementwise temporary is materialised.
    acc_ref[...] += jnp.einsum(
        "bos,bsh->boh", m.astype(x.dtype), x,
        preferred_element_type=jnp.float32)

    # Denominator: sum of the mask over this S-chunk (tiny lane reduction).
    den_ref[...] += jnp.sum(m, axis=2, keepdims=True)

    @pl.when(k == pl.num_programs(2) - 1)
    def _finalize():
        # clamp(min=1e-9) exactly like torch; divide only the (TB,1,1) vector
        # and broadcast-multiply, instead of dividing the full (TB,1,Hc) tile.
        inv = 1.0 / jnp.maximum(den_ref[...], 1e-9)
        o_ref[...] = (acc_ref[...] * inv).astype(o_ref.dtype)


def _choose_tiles(B, S, H, itemsize):
    """Pick (TB, Sc, Hc, vmem_limit_bytes) for a (B, S, H) input."""
    # Generation-aware VMEM capacity (v5e/v6e: 128 MiB, v7x: 64 MiB per core).
    vmem_cap = 64 << 20
    try:
        vmem_cap = int(pltpu.get_tpu_info().vmem_capacity_bytes)
    except Exception:
        pass
    # Per-buffer budget for the double-buffered x tile: multi-MiB blocks
    # amortise the ~0.35us per-grid-step overhead; bounded so 2x x-tiles plus
    # mask / output / accumulator buffers stay comfortably inside VMEM.
    x_budget = max(1 << 20, min(12 << 20, vmem_cap // 8))

    def x_bytes(tb, sc, hc):
        return tb * sc * hc * itemsize

    # Batch tile: prefer a multiple of 8, else the largest divisor of B <= 32.
    TB = None
    for t in (32, 16, 8):
        if B % t == 0:
            TB = t
            break
    if TB is None:
        TB = max(d for d in range(1, min(B, 32) + 1) if B % d == 0)

    # Hidden tile: largest multiple of 128 dividing H that fits the budget
    # (full H when H is not 128-divisible — full-extent blocks are legal).
    if H % 128 == 0:
        cands = [c for c in range(H, 0, -128) if H % c == 0]  # descending
        Hc = cands[-1]                                         # 128 fallback
        for c in cands:
            if x_bytes(TB, S, c) <= x_budget:
                Hc = c
                break
    else:
        Hc = H

    # Sequence tile: chunk the reduction axis only if still over budget.
    # Sc must be a multiple of 128 (mask block's lane dim) or the full S.
    Sc = S
    if x_bytes(TB, Sc, Hc) > x_budget:
        scands = [d for d in range(S - S % 128, 0, -128) if d and S % d == 0]
        for c in scands:                                       # descending
            Sc = c
            if x_bytes(TB, c, Hc) <= x_budget:
                break

    # Last resort: shrink the batch tile to smaller divisors of B.
    while TB > 1 and x_bytes(TB, Sc, Hc) > x_budget:
        TB = max(d for d in range(1, TB) if B % d == 0)

    # v7x has 2 TensorCores/chip: keep >=2 blocks on a "parallel" axis so the
    # grid can be sharded instead of idling a core.
    if (B // TB) * (H // Hc) == 1:
        if B > 1:
            TB = max(d for d in range(1, B) if B % d == 0)
        elif H % 128 == 0 and H >= 256:
            hsplit = [c for c in range(H // 2, 127, -1)
                      if H % c == 0 and c % 128 == 0]
            if hsplit:
                Hc = hsplit[0]

    # Scoped-VMEM limit from the actual footprint (double-buffered inputs and
    # output, sublane-padded mask/out tiles, f32 accumulators) plus headroom.
    sub = 8  # sublane padding for tiles whose second-minor dim is 1
    footprint = (
        2 * x_bytes(TB, Sc, Hc)            # x tile, double-buffered
        + 2 * TB * sub * Sc * 4            # mask (TB,1,Sc) f32, padded, x2
        + 2 * TB * sub * Hc * 4            # out  (TB,1,Hc) f32, padded, x2
        + TB * sub * Hc * 4                # f32 accumulator scratch
        + TB * sub * 128 * 4               # denominator scratch
    )
    vmem_limit = max(48 << 20, int(footprint * 1.3) + (8 << 20))
    vmem_limit = min(vmem_limit, max(vmem_cap - (4 << 20), footprint + (4 << 20)))
    return TB, Sc, Hc, int(vmem_limit)


def mean_pooling(last_hidden_state: jax.Array, attention_mask: jax.Array) -> jax.Array:
    """Pallas masked mean pooling. x: [B, S, H], mask: [B, S] -> [B, H] (f32)."""
    B, S, H = last_hidden_state.shape
    # unsqueeze + float() done wrapper-side, but laid out lane-dense as
    # (B, 1, S) so the kernel's mask tile DMAs contiguously.
    mask3 = attention_mask.astype(jnp.float32).reshape(B, 1, S)

    itemsize = jnp.dtype(last_hidden_state.dtype).itemsize
    TB, Sc, Hc, vmem_limit = _choose_tiles(B, S, H, itemsize)
    grid = (B // TB, H // Hc, S // Sc)

    out3 = pl.pallas_call(
        _mean_pool_kernel,
        out_shape=jax.ShapeDtypeStruct((B, 1, H), jnp.float32),
        grid_spec=pltpu.PrefetchScalarGridSpec(
            num_scalar_prefetch=0,
            grid=grid,
            in_specs=[
                pl.BlockSpec((TB, Sc, Hc), lambda b, h, k: (b, k, h)),
                pl.BlockSpec((TB, 1, Sc), lambda b, h, k: (b, 0, k)),
            ],
            out_specs=pl.BlockSpec((TB, 1, Hc), lambda b, h, k: (b, 0, h)),
            scratch_shapes=[
                pltpu.VMEM((TB, 1, Hc), jnp.float32),   # sum_s(x * m) accumulator
                pltpu.VMEM((TB, 1, 1), jnp.float32),    # sum_s(m) accumulator
            ],
        ),
        compiler_params=pltpu.CompilerParams(
            dimension_semantics=("parallel", "parallel", "arbitrary"),
            vmem_limit_bytes=vmem_limit),
    )(last_hidden_state, mask3)
    return out3.reshape(B, H)


class MeanPooling:
    """Mirror of the PyTorch module: forward(last_hidden_state, attention_mask)."""

    def __init__(self):
        pass

    def forward(self, last_hidden_state, attention_mask):
        return mean_pooling(last_hidden_state, attention_mask)

    __call__ = forward


if __name__ == "__main__":
    key = jax.random.PRNGKey(0)
    B, S, H = 8, 16, 128    # small shapes: batch=8, seq=16, hidden=128
    x = jax.random.normal(key, (B, S, H), dtype=jnp.float32)
    lengths = jnp.array([16, 12, 8, 5, 16, 1, 10, 0], dtype=jnp.int32)
    mask = (jax.lax.broadcasted_iota(jnp.int32, (B, S), 1)
            < lengths[:, None]).astype(jnp.int32)

    module = MeanPooling()
    out = jax.block_until_ready(module.forward(x, mask))

    # Pure-JAX reference (mirrors the PyTorch forward exactly).
    mask_f = mask.astype(jnp.float32)[..., None]
    ref = (x * mask_f).sum(axis=1) / jnp.maximum(mask_f.sum(axis=1), 1e-9)

    assert out.shape == (B, H)
    assert out.dtype == jnp.float32
    assert jnp.allclose(out, ref, atol=1e-5, rtol=1e-5)
    print("KERNEL_OK")
</pallas_src>

<mosaic_0001>
module attributes {stable_mosaic.version = 11 : i64} {
  func.func @_mean_pool_kernel(%arg0: i32, %arg1: i32, %arg2: i32, %arg3: memref<4x16x128xf32, #tpu.memory_space<vmem>>, %arg4: memref<4x1x16xf32, #tpu.memory_space<vmem>>, %arg5: memref<4x1x128xf32, #tpu.memory_space<vmem>>, %arg6: memref<4x1x128xf32, #tpu.memory_space<vmem>>, %arg7: memref<4x1x1xf32, #tpu.memory_space<vmem>>) attributes {dimension_semantics = [#tpu.dimension_semantics<parallel>, #tpu.dimension_semantics<parallel>, #tpu.dimension_semantics<arbitrary>], iteration_bounds = array<i64: 2, 1, 1>, scalar_prefetch = 0 : i64, scratch_operands = 2 : i64, tpu.core_type = #tpu.core_type<tc>, window_params = [{transform_indices = @transform_0, window_bounds = array<i64: 4, 16, 128>}, {transform_indices = @transform_1, window_bounds = array<i64: 4, 1, 16>}, {transform_indices = @transform_2, window_bounds = array<i64: 4, 1, 128>}]} {
    %c0_i32 = arith.constant 0 : i32
    %0 = arith.cmpi eq, %arg2, %c0_i32 : i32
    %1 = arith.extui %0 : i1 to i32
    %c0_i32_0 = arith.constant 0 : i32
    %2 = arith.cmpi ne, %1, %c0_i32_0 : i32
    scf.if %2 {
      %cst_21 = arith.constant 0.000000e+00 : f32
      %17 = vector.broadcast %cst_21 : f32 to vector<4x1x128xf32>
      %c0_22 = arith.constant 0 : index
      %c0_23 = arith.constant 0 : index
      %c0_24 = arith.constant 0 : index
      %18 = vector.load %arg6[%c0_22, %c0_23, %c0_24] : memref<4x1x128xf32, #tpu.memory_space<vmem>>, vector<4x1x128xf32>
      tpu.vector_store %arg6[%c0_22, %c0_23, %c0_24], %17 {strides = array<i32>} : memref<4x1x128xf32, #tpu.memory_space<vmem>>, vector<4x1x128xf32>,
      %cst_25 = arith.constant 0.000000e+00 : f32
      %19 = vector.broadcast %cst_25 : f32 to vector<4x1x1xf32>
      %c0_26 = arith.constant 0 : index
      %c0_27 = arith.constant 0 : index
      %c0_28 = arith.constant 0 : index
      %20 = vector.load %arg7[%c0_26, %c0_27, %c0_28] : memref<4x1x1xf32, #tpu.memory_space<vmem>>, vector<4x1x1xf32>
      tpu.vector_store %arg7[%c0_26, %c0_27, %c0_28], %19 {strides = array<i32>} : memref<4x1x1xf32, #tpu.memory_space<vmem>>, vector<4x1x1xf32>,
    } else {
    }
    %c0 = arith.constant 0 : index
    %c0_1 = arith.constant 0 : index
    %c0_2 = arith.constant 0 : index
    %3 = vector.load %arg3[%c0, %c0_1, %c0_2] : memref<4x16x128xf32, #tpu.memory_space<vmem>>, vector<4x16x128xf32>
    %c0_3 = arith.constant 0 : index
    %c0_4 = arith.constant 0 : index
    %c0_5 = arith.constant 0 : index
    %4 = vector.load %arg4[%c0_3, %c0_4, %c0_5] : memref<4x1x16xf32, #tpu.memory_space<vmem>>, vector<4x1x16xf32>
    %c0_6 = arith.constant 0 : index
    %c0_7 = arith.constant 0 : index
    %c0_8 = arith.constant 0 : index
    %5 = vector.load %arg6[%c0_6, %c0_7, %c0_8] : memref<4x1x128xf32, #tpu.memory_space<vmem>>, vector<4x1x128xf32>
    "tpu.trace_start"() <{level = 10 : i32, message = "bos,bsh->boh"}> : () -> ()
    %cst = arith.constant dense<0.000000e+00> : vector<4x1x128xf32>
    %6 = tpu.matmul %4, %3, %cst {dimension_numbers = #tpu.dot_dimension_numbers<[2], [1], [1], [2], [0, 0, 0, 1, 1, 2], [0], [0]>} : vector<4x1x16xf32>, vector<4x16x128xf32>, vector<4x1x128xf32> -> vector<4x1x128xf32>
    "tpu.trace_stop"() : () -> ()
    %7 = arith.addf %5, %6 : vector<4x1x128xf32>
    %c0_9 = arith.constant 0 : index
    %c0_10 = arith.constant 0 : index
    %c0_11 = arith.constant 0 : index
    %8 = vector.load %arg6[%c0_9, %c0_10, %c0_11] : memref<4x1x128xf32, #tpu.memory_space<vmem>>, vector<4x1x128xf32>
    tpu.vector_store %arg6[%c0_9, %c0_10, %c0_11], %7 {strides = array<i32>} : memref<4x1x128xf32, #tpu.memory_space<vmem>>, vector<4x1x128xf32>,
    %c0_12 = arith.constant 0 : index
    %c0_13 = arith.constant 0 : index
    %c0_14 = arith.constant 0 : index
    %9 = vector.load %arg7[%c0_12, %c0_13, %c0_14] : memref<4x1x1xf32, #tpu.memory_space<vmem>>, vector<4x1x1xf32>
    %cst_15 = arith.constant dense<0.000000e+00> : vector<4x1xf32>
    %10 = vector.multi_reduction <add>, %4, %cst_15 [2] : vector<4x1x16xf32> to vector<4x1xf32>
    %11 = vector.shape_cast %10 : vector<4x1xf32> to vector<4x1x1xf32>
    %12 = arith.addf %9, %11 : vector<4x1x1xf32>
    %c0_16 = arith.constant 0 : index
    %c0_17 = arith.constant 0 : index
    %c0_18 = arith.constant 0 : index
    %13 = vector.load %arg7[%c0_16, %c0_17, %c0_18] : memref<4x1x1xf32, #tpu.memory_space<vmem>>, vector<4x1x1xf32>
    tpu.vector_store %arg7[%c0_16, %c0_17, %c0_18], %12 {strides = array<i32>} : memref<4x1x1xf32, #tpu.memory_space<vmem>>, vector<4x1x1xf32>,
    %c0_i32_19 = arith.constant 0 : i32
    %14 = arith.cmpi eq, %arg2, %c0_i32_19 : i32
    %15 = arith.extui %14 : i1 to i32
    %c0_i32_20 = arith.constant 0 : i32
    %16 = arith.cmpi ne, %15, %c0_i32_20 : i32
    scf.if %16 {
      %c0_21 = arith.constant 0 : index
      %c0_22 = arith.constant 0 : index
      %c0_23 = arith.constant 0 : index
      %17 = vector.load %arg7[%c0_21, %c0_22, %c0_23] : memref<4x1x1xf32, #tpu.memory_space<vmem>>, vector<4x1x1xf32>
      %cst_24 = arith.constant 9.99999971E-10 : f32
      %18 = vector.broadcast %cst_24 : f32 to vector<4x1x1xf32>
      %19 = arith.maximumf %17, %18 : vector<4x1x1xf32>
      %cst_25 = arith.constant 1.000000e+00 : f32
      %20 = vector.broadcast %cst_25 : f32 to vector<4x1x1xf32>
      %21 = arith.divf %20, %19 : vector<4x1x1xf32>
      %c0_26 = arith.constant 0 : index
      %c0_27 = arith.constant 0 : index
      %c0_28 = arith.constant 0 : index
      %22 = vector.load %arg6[%c0_26, %c0_27, %c0_28] : memref<4x1x128xf32, #tpu.memory_space<vmem>>, vector<4x1x128xf32>
      %23 = vector.broadcast %21 : vector<4x1x1xf32> to vector<4x1x128xf32>
      %24 = arith.mulf %22, %23 : vector<4x1x128xf32>
      %c0_29 = arith.constant 0 : index
      %c0_30 = arith.constant 0 : index
      %c0_31 = arith.constant 0 : index
      %25 = vector.load %arg5[%c0_29, %c0_30, %c0_31] : memref<4x1x128xf32, #tpu.memory_space<vmem>>, vector<4x1x128xf32>
      tpu.vector_store %arg5[%c0_29, %c0_30, %c0_31], %24 {strides = array<i32>} : memref<4x1x128xf32, #tpu.memory_space<vmem>>, vector<4x1x128xf32>,
    } else {
    }
    return
  }
  func.func @transform_0(%arg0: i32, %arg1: i32, %arg2: i32) -> (i32, i32, i32) {
    %c0_i32 = arith.constant 0 : i32
    return %arg0, %arg2, %arg1 : i32, i32, i32
  }
  func.func @transform_1(%arg0: i32, %arg1: i32, %arg2: i32) -> (i32, i32, i32) {
    %c0_i32 = arith.constant 0 : i32
    %c0_i32_0 = arith.constant 0 : i32
    return %arg0, %c0_i32, %arg2 : i32, i32, i32
  }
  func.func @transform_2(%arg0: i32, %arg1: i32, %arg2: i32) -> (i32, i32, i32) {
    %c0_i32 = arith.constant 0 : i32
    %c0_i32_0 = arith.constant 0 : i32
    return %arg0, %c0_i32, %arg1 : i32, i32, i32
  }
}

</mosaic_0001>

<llo_original>
// kernel: tpu_custom_call.1
$region0: #{tpu_custom_call.1}
  #allocation0 [shape = 'u32[]', space=smem, size = 0x4, offset = 0x4, fixed_abs, tag = 'smem constant byte address 0x4 - core index']
  #allocation1 [shape = 'u32[144,128]{1,0:T(1,128)}', space=vmem, size = 0x12000, scoped, tag = 'internal scratch']
  #allocation2 [shape = 'f32[4,1,128]{2,1,0:T(1,128)}', space=vmem, size = 0x800, scoped, tag = 'scratch operand']
  #allocation3 [shape = 'f32[4,1,1]{2,1,0:T(1,128)}', space=vmem, size = 0x800, scoped, tag = 'scratch operand']
  %s0 = inlined_call_operand.hbm [shape: f32[8,16,128], index: 0, kind: input, shape index: {}]
  %s1 = inlined_call_operand.hbm [shape: f32[8,1,16], index: 1, kind: input, shape index: {}]
  %s2 = inlined_call_operand.hbm [shape: f32[8,1,128], index: 2, kind: output, shape index: {}]
  %s3 = sld [smem:[#allocation0]]
  $region57: #{tpu_custom_call.1} parent=0
    _
  %s5 = ssub.s32 1, %s3
  %s6 = scalar_select 0, %s5, %s3
  $region1: #{tpu_custom_call.1} parent=0
    #allocation4 [shape = 'u8[65536]{0}', space=vmem, size = 0x10000, scoped, tag = 'input window, operand 0']
    #allocation5 [shape = 's32[2]{0}', space=sflag, size = 0x8, scoped, tag = 'scoped memory for tpu_custom_call.1']
    #allocation6 [shape = 's32[2]{0}', space=sflag, size = 0x8, scoped, tag = 'scoped memory for tpu_custom_call.1']
    #allocation7 [shape = 'u8[4096]{0}', space=vmem, size = 0x1000, scoped, tag = 'input window, operand 1']
    #allocation8 [shape = 's32[2]{0}', space=sflag, size = 0x8, scoped, tag = 'scoped memory for tpu_custom_call.1']
    #allocation9 [shape = 'u8[4096]{0}', space=vmem, size = 0x1000, scoped, tag = 'output window, operand 0']
    %7 = vsyncpa [#allocation5], 0
    %s8 = scalar_lea.sflag [#allocation5], 1
    %9 = vsyncpa %s8, 0
    %10 = vsyncpa [#allocation8], 0
    %s11 = scalar_lea.sflag [#allocation8], 1
    %12 = vsyncpa %s11, 0
    %13 = vsyncpa [#allocation6], 0
    %s14 = scalar_lea.sflag [#allocation6], 1
    %15 = vsyncpa %s14, 0
    loop: start=0, step=1, limit=4
    $region2: #{tpu_custom_call.1} parent=1 // loop_pre_header
      _
    $region3: #{tpu_custom_call.1} parent=1 // loop_header
      %s17 = sphi 0, %s21
      %p18 = scmp.ge.s32.totalorder %s17, 4
      %s24 = sphi 0, %s43
      %s25 = sphi 0, %s39
      %s26 = sphi 0, %s35
      %s27 = sphi 0, %s24
      %s28 = sphi 0, %s25
      %s29 = sphi 0, %s26
      %s30 = sphi 0, %s27
      %s31 = sphi 0, %s28
      %s32 = sphi 0, %s29
      %s50 = sphi 0, %s52
      %s53 = sphi 0, %s50
      %s54 = sphi 0, %s53
      %s70 = sphi 0, %s54
      %s78 = sphi 0, %s80
      %s81 = sphi 0, %s78
      %s82 = sphi 0, %s81
      %s98 = sphi 0, %s82
      %s106 = sphi 0, %s108
      %s109 = sphi 0, %s106
      %s110 = sphi 0, %s109
      %s126 = sphi 0, %s110
    $region4: #{tpu_custom_call.1} parent=1 // loop_header_branch
      %20 = sbr.rel (%p18) target = $region8
    $region5: #{tpu_custom_call.1} parent=1 // loop_body
      %s22 = ssub.s32 %s17, 1
      %s23 = ssub.s32 %s17, 2
      %s33 = sadd.s32 1, %s26
      %p34 = scmp.ge.s32.totalorder %s33, 1
      %s35 = scalar_select %p34, 0, %s33
      %s36 = sadd.s32 1, %s25
      %s37 = scalar_select %p34, %s36, %s25
      %p38 = scmp.ge.s32.totalorder %s37, 1
      %s39 = scalar_select %p38, 0, %s37
      %s40 = sadd.s32 1, %s24
      %s41 = scalar_select %p38, %s40, %s24
      %p42 = scmp.ge.s32.totalorder %s41, 2
      %s43 = scalar_select %p42, 0, %s41
      %s44 = ssub.s32 %s24, %s43
      %s45 = ssub.s32 %s26, %s35
      %s46 = sor.u32 %s44, %s45
      %s47 = ssub.s32 %s25, %s39
      %s48 = sor.u32 %s46, %s47
      %p49 = scmp.eq.s32.totalorder %s48, 0
      %s51 = sadd.s32 %s50, 1
      %s52 = scalar_select %p49, %s50, %s51
      %p55 = pneg %p49
      %p56 = scmp.eq.s32.totalorder %s17, 1
      %p57 = por %p55, %p56
      %p58 = scmp.ne.s32.totalorder %s50, %s53
      %p59 = scmp.eq.s32.totalorder %s17, 0
      %p60 = por %p58, %p59
      %p61 = scmp.ne.s32.totalorder %s50, %s53
      %p62 = scmp.eq.s32.totalorder %s22, 1
      %p63 = por %p61, %p62
      %p64 = scmp.ne.s32.totalorder %s53, %s54
      %p65 = scmp.eq.s32.totalorder %s22, 0
      %p66 = por %p64, %p65
      %p67 = scmp.ne.s32.totalorder %s53, %s54
      %p68 = scmp.eq.s32.totalorder %s23, 1
      %p69 = por %p67, %p68
      %p71 = scmp.ne.s32.totalorder %s54, %s70
      %p72 = scmp.eq.s32.totalorder %s23, 0
      %p73 = por %p71, %p72
      %s74 = ssub.s32 %s24, %s43
      %s75 = ssub.s32 %s26, %s35
      %s76 = sor.u32 %s74, %s75
      %p77 = scmp.eq.s32.totalorder %s76, 0
      %s79 = sadd.s32 %s78, 1
      %s80 = scalar_select %p77, %s78, %s79
      %p83 = pneg %p77
      %p84 = scmp.eq.s32.totalorder %s17, 1
      %p85 = por %p83, %p84
      %p86 = scmp.ne.s32.totalorder %s78, %s81
      %p87 = scmp.eq.s32.totalorder %s17, 0
      %p88 = por %p86, %p87
      %p89 = scmp.ne.s32.totalorder %s78, %s81
      %p90 = scmp.eq.s32.totalorder %s22, 1
      %p91 = por %p89, %p90
      %p92 = scmp.ne.s32.totalorder %s81, %s82
      %p93 = scmp.eq.s32.totalorder %s22, 0
      %p94 = por %p92, %p93
      %p95 = scmp.ne.s32.totalorder %s81, %s82
      %p96 = scmp.eq.s32.totalorder %s23, 1
      %p97 = por %p95, %p96
      %p99 = scmp.ne.s32.totalorder %s82, %s98
      %p100 = scmp.eq.s32.totalorder %s23, 0
      %p101 = por %p99, %p100
      %s102 = ssub.s32 %s24, %s43
      %s103 = ssub.s32 %s25, %s39
      %s104 = sor.u32 %s102, %s103
      %p105 = scmp.eq.s32.totalorder %s104, 0
      %s107 = sadd.s32 %s106, 1
      %s108 = scalar_select %p105, %s106, %s107
      %p111 = pneg %p105
      %p112 = scmp.eq.s32.totalorder %s17, 1
      %p113 = por %p111, %p112
      %p114 = scmp.ne.s32.totalorder %s106, %s109
      %p115 = scmp.eq.s32.totalorder %s17, 0
      %p116 = por %p114, %p115
      %p117 = scmp.ne.s32.totalorder %s106, %s109
      %p118 = scmp.eq.s32.totalorder %s22, 1
      %p119 = por %p117, %p118
      %p120 = scmp.ne.s32.totalorder %s109, %s110
      %p121 = scmp.eq.s32.totalorder %s22, 0
      %p122 = por %p120, %p121
      %p123 = scmp.ne.s32.totalorder %s109, %s110
      %p124 = scmp.eq.s32.totalorder %s23, 1
      %p125 = por %p123, %p124
      %p127 = scmp.ne.s32.totalorder %s110, %s126
      %p128 = scmp.eq.s32.totalorder %s23, 0
      %p129 = por %p127, %p128
      %p130 = scmp.le.s32.totalorder 1, %s17
      %p131 = scmp.lt.s32.totalorder %s17, 3
      %p132 = pnand %p130, %p131
      %p133 = pneg %p132
      // Predicated region
      $region9: #{tpu_custom_call.1} parent=5 // pred_check
        _
      $region10: #{tpu_custom_call.1} parent=5 // pred_check_branch
        %135 = sbr.rel (%p132) target = $region12
      $region11: #{tpu_custom_call.1} parent=5 // pred_region
        %s136 = ssub.s32 %s17, 1
      $region12: #{tpu_custom_call.1} parent=5 // pred_fallthru
        _
      %p137 = scmp.lt.s32.totalorder %s17, 2
      // Predicated region
      $region13: #{tpu_custom_call.1} parent=5 // pred_check
        %p138 = pneg %p137
      $region14: #{tpu_custom_call.1} parent=5 // pred_check_branch
        %140 = sbr.rel (%p138) target = $region16
      $region15: #{tpu_custom_call.1} parent=5 // pred_region
        // Predicated region
        $region17: #{tpu_custom_call.1} parent=15 // pred_check
          %p141 = pneg %p60
        $region18: #{tpu_custom_call.1} parent=15 // pred_check_branch
          %143 = sbr.rel (%p141) target = $region20
        $region19: #{tpu_custom_call.1} parent=15 // pred_region
          %s144 = sand.u32 %s50, 1
          %s145 = scalar_lea.sflag [#allocation5], %s144
          %s146 = sand.u32 %s50, 1
          %s147 = smul.addr %s146, 64
          %s148 = scalar_lea.vmem [#allocation4], %s147
          %s149 = smul.u32 4, %s24
          %s150 = smul.u32 2, %s26
          %s152 = ssub.s32 1024, 1024
          %153 = vsyncadd %s145, %s152
          %s154 = sadd.s32 %s25, %s150
          %s155 = smul.addr %s149, 2
          %s156 = sadd.s32 %s154, %s155
          %s157 = smul.addr %s156, 128
          %s158 = scalar_lea.hbm %s0, %s157
          %s159 = sshll.u32 %s148, 4
          %s160 = int_to_ptr.vmem [resolvable:$true] %s159
          %165 = dma.hbm_to_vmem [thread:$0]  %s158, 1024, %s160, %s145, 128, 128, 8
        $region20: #{tpu_custom_call.1} parent=15 // pred_fallthru
          _
        // Predicated region
        $region21: #{tpu_custom_call.1} parent=15 // pred_check
          %p166 = pneg %p88
        $region22: #{tpu_custom_call.1} parent=15 // pred_check_branch
          %168 = sbr.rel (%p166) target = $region24
        $region23: #{tpu_custom_call.1} parent=15 // pred_region
          %s169 = sand.u32 %s78, 1
          %s170 = scalar_lea.sflag [#allocation8], %s169
          %s171 = sand.u32 %s78, 1
          %s172 = smul.addr %s171, 4
          %s173 = scalar_lea.vmem [#allocation7], %s172
          %s174 = smul.u32 4, %s24
          %s176 = ssub.s32 64, 64
          %177 = vsyncadd %s170, %s176
          %s178 = sadd.s32 %s26, %s174
          %s179 = smul.addr %s178, 16
          %s180 = scalar_lea.hbm %s1, %s179
          %s181 = sshll.u32 %s173, 4
          %s182 = int_to_ptr.vmem [resolvable:$true] %s181
          %187 = dma.hbm_to_vmem [thread:$0]  %s180, 64, %s182, %s170, 16, 16, 1
        $region24: #{tpu_custom_call.1} parent=15 // pred_fallthru
          _
      $region16: #{tpu_custom_call.1} parent=5 // pred_fallthru
        _
      %p188 = scmp.le.s32.totalorder 1, %s17
      %p189 = scmp.lt.s32.totalorder %s17, 3
      %p190 = pnand %p188, %p189
      %p191 = pneg %p190
      // Predicated region
      $region25: #{tpu_custom_call.1} parent=5 // pred_check
        _
      $region26: #{tpu_custom_call.1} parent=5 // pred_check_branch
        %193 = sbr.rel (%p190) target = $region28
      $region27: #{tpu_custom_call.1} parent=5 // pred_region
        %s194 = ssub.s32 %s17, 1
        %s195 = sand.u32 %s53, 1
        %s196 = scalar_lea.sflag [#allocation5], %s195
        %s197 = sand.u32 %s53, 1
        %s198 = smul.addr %s197, 64
        %s199 = scalar_lea.vmem [#allocation4], %s198
        // Predicated region
        $region29: #{tpu_custom_call.1} parent=27 // pred_check
          %p200 = pneg %p66
        $region30: #{tpu_custom_call.1} parent=27 // pred_check_branch
          %202 = sbr.rel (%p200) target = $region32
        $region31: #{tpu_custom_call.1} parent=27 // pred_region
          %203 = dma.done %s196, 1024
        $region32: #{tpu_custom_call.1} parent=27 // pred_fallthru
          _
        %s204 = sand.u32 %s81, 1
        %s205 = scalar_lea.sflag [#allocation8], %s204
        %s206 = sand.u32 %s81, 1
        %s207 = smul.addr %s206, 4
        %s208 = scalar_lea.vmem [#allocation7], %s207
        // Predicated region
        $region33: #{tpu_custom_call.1} parent=27 // pred_check
          %p209 = pneg %p94
        $region34: #{tpu_custom_call.1} parent=27 // pred_check_branch
          %211 = sbr.rel (%p209) target = $region36
        $region35: #{tpu_custom_call.1} parent=27 // pred_region
          %212 = dma.done %s205, 64
        $region36: #{tpu_custom_call.1} parent=27 // pred_fallthru
          _
        %s213 = sand.u32 %s53, 1
        %s214 = scalar_lea.sflag [#allocation5], %s213
        %s215 = sand.u32 %s53, 1
        %s216 = smul.addr %s215, 64
        %s217 = scalar_lea.vmem [#allocation4], %s216
        %p218 = pneg %p66
        %p219 = pneg %p63
        %s220 = sand.u32 %s81, 1
        %s221 = scalar_lea.sflag [#allocation8], %s220
        %s222 = sand.u32 %s81, 1
        %s223 = smul.addr %s222, 4
        %s224 = scalar_lea.vmem [#allocation7], %s223
        %p225 = pneg %p94
        %p226 = pneg %p91
        %p227 = pneg %p122
        %p228 = pneg %p119
        %s229 = sand.u32 %s109, 1
        %s230 = scalar_lea.sflag [#allocation6], %s229
        %s231 = sand.u32 %s109, 1
        %s232 = smul.addr %s231, 4
        %s233 = scalar_lea.vmem [#allocation9], %s232
        %s234 = smul.u32 4, %s27
        %s235 = smul.u32 2, %s29
        %s236 = smul.u32 4, %s27
        %s237 = smul.u32 4, %s27
        %p238 = scmp.eq.s32.totalorder %s29, 0
        // Predicated region
        $region37: #{tpu_custom_call.1} parent=27 // pred_check
          %p239 = pneg %p238
        $region38: #{tpu_custom_call.1} parent=27 // pred_check_branch
          %241 = sbr.rel (%p239) target = $region40
        $region39: #{tpu_custom_call.1} parent=27 // pred_region
          %242 = vst [vmem:[#allocation2] sm:$0x1] 0.0
          %243 = vst [vmem:[#allocation2 + $0x1] sm:$0x1] 0.0
          %244 = vst [vmem:[#allocation2 + $0x2] sm:$0x1] 0.0
          %245 = vst [vmem:[#allocation2 + $0x3] sm:$0x1] 0.0
          %vm246 = vcmask 0
          %247 = vst.msk [vmem:[#allocation3] sm:$0x1] %vm246, 0.0
          %248 = vst.msk [vmem:[#allocation3 + $0x1] sm:$0x1] %vm246, 0.0
          %249 = vst.msk [vmem:[#allocation3 + $0x2] sm:$0x1] %vm246, 0.0
          %250 = vst.msk [vmem:[#allocation3 + $0x3] sm:$0x1] %vm246, 0.0
        $region40: #{tpu_custom_call.1} parent=27 // pred_fallthru
          _
        %v251 = vld [vmem:[%s199] sm:$0xff]
        %v252 = vld [vmem:[%s199 + $0x8] sm:$0xff]
        %v253 = vld [vmem:[%s199 + $0x10] sm:$0xff]
        %v254 = vld [vmem:[%s199 + $0x18] sm:$0xff]
        %v255 = vld [vmem:[%s199 + $0x20] sm:$0xff]
        %v256 = vld [vmem:[%s199 + $0x28] sm:$0xff]
        %v257 = vld [vmem:[%s199 + $0x30] sm:$0xff]
        %v258 = vld [vmem:[%s199 + $0x38] sm:$0xff]
        %v259 = vld [vmem:[%s208] sm:$0x1]
        %v260 = vld [vmem:[%s208 + $0x1] sm:$0x1]
        %v261 = vld [vmem:[%s208 + $0x2] sm:$0x1]
        %v262 = vld [vmem:[%s208 + $0x3] sm:$0x1]
        %v263 = vld [vmem:[#allocation2] sm:$0x1]
        %v264 = vld [vmem:[#allocation2 + $0x1] sm:$0x1]
        %v265 = vld [vmem:[#allocation2 + $0x2] sm:$0x1]
        %v266 = vld [vmem:[#allocation2 + $0x3] sm:$0x1]
        %vm267 = vcmask 130048
        %v269 = vsel %vm267, %v259, 0
        %271 = vmatprep.subr.mxu0 0.0
        %272 = vmatpush1.msra.mxu0 0.0
        %273 = vmatprep.subr.mxu0 0.0
        %274 = vmatpush1.msra.mxu0 0.0
        %275 = vmatprep.subr.mxu0 0.0
        %276 = vmatpush1.msra.mxu0 0.0
        %277 = vmatprep.subr.mxu0 0.0
        %278 = vmatpush1.msra.mxu0 0.0
        %279 = vmatprep.subr.mxu0 0.0
        %280 = vmatpush1.msra.mxu0 0.0
        %281 = vmatprep.subr.mxu0 0.0
        %282 = vmatpush1.msra.mxu0 0.0
        %283 = vmatprep.subr.mxu0 0.0
        %284 = vmatpush1.msra.mxu0 0.0
        %285 = vmatprep.subr.mxu0 0.0
        %286 = vmatpush1.msra.mxu0 0.0
        %287 = vmatprep.subr.mxu0 0.0
        %288 = vmatpush1.msra.mxu0 0.0
        %289 = vmatprep.subr.mxu0 0.0
        %290 = vmatpush1.msra.mxu0 0.0
        %291 = vmatprep.subr.mxu0 0.0
        %292 = vmatpush1.msra.mxu0 0.0
        %293 = vmatprep.subr.mxu0 0.0
        %294 = vmatpush1.msra.mxu0 0.0
        %295 = vmatprep.subr.mxu0 0.0
        %296 = vmatpush1.msra.mxu0 0.0
        %297 = vmatprep.subr.mxu0 0.0
        %298 = vmatpush1.msra.mxu0 0.0
        %299 = vmatprep.subr.mxu0 0.0
        %300 = vmatpush1.msra.mxu0 %v252
        %301 = vmatprep.subr.mxu0 0.0
        %302 = vmatpush1.msra.mxu0 %v251
        %303 = vmatprep.subr.mxu0 0.0
        %304 = vmatpush2.msra.mxu0 0.0
        %305 = vmatprep.subr.mxu0 0.0
        %306 = vmatpush2.msra.mxu0 0.0
        %307 = vmatprep.subr.mxu0 0.0
        %308 = vmatpush2.msra.mxu0 0.0
        %309 = vmatprep.subr.mxu0 0.0
        %310 = vmatpush2.msra.mxu0 0.0
        %311 = vmatprep.subr.mxu0 0.0
        %312 = vmatpush2.msra.mxu0 0.0
        %313 = vmatprep.subr.mxu0 0.0
        %314 = vmatpush2.msra.mxu0 0.0
        %315 = vmatprep.subr.mxu0 0.0
        %316 = vmatpush2.msra.mxu0 0.0
        %317 = vmatprep.subr.mxu0 0.0
        %318 = vmatpush2.msra.mxu0 0.0
        %319 = vmatprep.subr.mxu0 0.0
        %320 = vmatpush2.msra.mxu0 0.0
        %321 = vmatprep.subr.mxu0 0.0
        %322 = vmatpush2.msra.mxu0 0.0
        %323 = vmatprep.subr.mxu0 0.0
        %324 = vmatpush2.msra.mxu0 0.0
        %325 = vmatprep.subr.mxu0 0.0
        %326 = vmatpush2.msra.mxu0 0.0
        %327 = vmatprep.subr.mxu0 0.0
        %328 = vmatpush2.msra.mxu0 0.0
        %329 = vmatprep.subr.mxu0 0.0
        %330 = vmatpush2.msra.mxu0 0.0
        %331 = vmatprep.subr.mxu0 0.0
        %332 = vmatpush2.msra.mxu0 0.0
        %333 = vmatprep.subr.mxu0 0.0
        %334 = vmatpush2.msra.mxu0 0.0
        %335 = vmatprep.mubr.f32.mxu0 0.0
        %336 = vmatmul.mubr.f32.gmra.mxu0 %v269
        %v337 = vpop.f32.mrf.mxu0
        %v338 = vadd.f32 0.0, %v337
        %v339 = vpop.f32.mrf.mxu0
        %340 = vdwg.mxu0
        %v342 = vsel %vm267, %v260, 0
        %344 = vmatprep.subr.mxu0 0.0
        %345 = vmatpush1.msra.mxu0 0.0
        %346 = vmatprep.subr.mxu0 0.0
        %347 = vmatpush1.msra.mxu0 0.0
        %348 = vmatprep.subr.mxu0 0.0
        %349 = vmatpush1.msra.mxu0 0.0
        %350 = vmatprep.subr.mxu0 0.0
        %351 = vmatpush1.msra.mxu0 0.0
        %352 = vmatprep.subr.mxu0 0.0
        %353 = vmatpush1.msra.mxu0 0.0
        %354 = vmatprep.subr.mxu0 0.0
        %355 = vmatpush1.msra.mxu0 0.0
        %356 = vmatprep.subr.mxu0 0.0
        %357 = vmatpush1.msra.mxu0 0.0
        %358 = vmatprep.subr.mxu0 0.0
        %359 = vmatpush1.msra.mxu0 0.0
        %360 = vmatprep.subr.mxu0 0.0
        %361 = vmatpush1.msra.mxu0 0.0
        %362 = vmatprep.subr.mxu0 0.0
        %363 = vmatpush1.msra.mxu0 0.0
        %364 = vmatprep.subr.mxu0 0.0
        %365 = vmatpush1.msra.mxu0 0.0
        %366 = vmatprep.subr.mxu0 0.0
        %367 = vmatpush1.msra.mxu0 0.0
        %368 = vmatprep.subr.mxu0 0.0
        %369 = vmatpush1.msra.mxu0 0.0
        %370 = vmatprep.subr.mxu0 0.0
        %371 = vmatpush1.msra.mxu0 0.0
        %372 = vmatprep.subr.mxu0 0.0
        %373 = vmatpush1.msra.mxu0 %v254
        %374 = vmatprep.subr.mxu0 0.0
        %375 = vmatpush1.msra.mxu0 %v253
        %376 = vmatprep.subr.mxu0 0.0
        %377 = vmatpush2.msra.mxu0 0.0
        %378 = vmatprep.subr.mxu0 0.0
        %379 = vmatpush2.msra.mxu0 0.0
        %380 = vmatprep.subr.mxu0 0.0
        %381 = vmatpush2.msra.mxu0 0.0
        %382 = vmatprep.subr.mxu0 0.0
        %383 = vmatpush2.msra.mxu0 0.0
        %384 = vmatprep.subr.mxu0 0.0
        %385 = vmatpush2.msra.mxu0 0.0
        %386 = vmatprep.subr.mxu0 0.0
        %387 = vmatpush2.msra.mxu0 0.0
        %388 = vmatprep.subr.mxu0 0.0
        %389 = vmatpush2.msra.mxu0 0.0
        %390 = vmatprep.subr.mxu0 0.0
        %391 = vmatpush2.msra.mxu0 0.0
        %392 = vmatprep.subr.mxu0 0.0
        %393 = vmatpush2.msra.mxu0 0.0
        %394 = vmatprep.subr.mxu0 0.0
        %395 = vmatpush2.msra.mxu0 0.0
        %396 = vmatprep.subr.mxu0 0.0
        %397 = vmatpush2.msra.mxu0 0.0
        %398 = vmatprep.subr.mxu0 0.0
        %399 = vmatpush2.msra.mxu0 0.0
        %400 = vmatprep.subr.mxu0 0.0
        %401 = vmatpush2.msra.mxu0 0.0
        %402 = vmatprep.subr.mxu0 0.0
        %403 = vmatpush2.msra.mxu0 0.0
        %404 = vmatprep.subr.mxu0 0.0
        %405 = vmatpush2.msra.mxu0 0.0
        %406 = vmatprep.subr.mxu0 0.0
        %407 = vmatpush2.msra.mxu0 0.0
        %408 = vmatprep.mubr.f32.mxu0 0.0
        %409 = vmatmul.mubr.f32.gmra.mxu0 %v342
        %v410 = vpop.f32.mrf.mxu0
        %v411 = vadd.f32 0.0, %v410
        %v412 = vpop.f32.mrf.mxu0
        %413 = vdwg.mxu0
        %v415 = vsel %vm267, %v261, 0
        %417 = vmatprep.subr.mxu0 0.0
        %418 = vmatpush1.msra.mxu0 0.0
        %419 = vmatprep.subr.mxu0 0.0
        %420 = vmatpush1.msra.mxu0 0.0
        %421 = vmatprep.subr.mxu0 0.0
        %422 = vmatpush1.msra.mxu0 0.0
        %423 = vmatprep.subr.mxu0 0.0
        %424 = vmatpush1.msra.mxu0 0.0
        %425 = vmatprep.subr.mxu0 0.0
        %426 = vmatpush1.msra.mxu0 0.0
        %427 = vmatprep.subr.mxu0 0.0
        %428 = vmatpush1.msra.mxu0 0.0
        %429 = vmatprep.subr.mxu0 0.0
        %430 = vmatpush1.msra.mxu0 0.0
        %431 = vmatprep.subr.mxu0 0.0
        %432 = vmatpush1.msra.mxu0 0.0
        %433 = vmatprep.subr.mxu0 0.0
        %434 = vmatpush1.msra.mxu0 0.0
        %435 = vmatprep.subr.mxu0 0.0
        %436 = vmatpush1.msra.mxu0 0.0
        %437 = vmatprep.subr.mxu0 0.0
        %438 = vmatpush1.msra.mxu0 0.0
        %439 = vmatprep.subr.mxu0 0.0
        %440 = vmatpush1.msra.mxu0 0.0
        %441 = vmatprep.subr.mxu0 0.0
        %442 = vmatpush1.msra.mxu0 0.0
        %443 = vmatprep.subr.mxu0 0.0
        %444 = vmatpush1.msra.mxu0 0.0
        %445 = vmatprep.subr.mxu0 0.0
        %446 = vmatpush1.msra.mxu0 %v256
        %447 = vmatprep.subr.mxu0 0.0
        %448 = vmatpush1.msra.mxu0 %v255
        %449 = vmatprep.subr.mxu0 0.0
        %450 = vmatpush2.msra.mxu0 0.0
        %451 = vmatprep.subr.mxu0 0.0
        %452 = vmatpush2.msra.mxu0 0.0
        %453 = vmatprep.subr.mxu0 0.0
        %454 = vmatpush2.msra.mxu0 0.0
        %455 = vmatprep.subr.mxu0 0.0
        %456 = vmatpush2.msra.mxu0 0.0
        %457 = vmatprep.subr.mxu0 0.0
        %458 = vmatpush2.msra.mxu0 0.0
        %459 = vmatprep.subr.mxu0 0.0
        %460 = vmatpush2.msra.mxu0 0.0
        %461 = vmatprep.subr.mxu0 0.0
        %462 = vmatpush2.msra.mxu0 0.0
        %463 = vmatprep.subr.mxu0 0.0
        %464 = vmatpush2.msra.mxu0 0.0
        %465 = vmatprep.subr.mxu0 0.0
        %466 = vmatpush2.msra.mxu0 0.0
        %467 = vmatprep.subr.mxu0 0.0
        %468 = vmatpush2.msra.mxu0 0.0
        %469 = vmatprep.subr.mxu0 0.0
        %470 = vmatpush2.msra.mxu0 0.0
        %471 = vmatprep.subr.mxu0 0.0
        %472 = vmatpush2.msra.mxu0 0.0
        %473 = vmatprep.subr.mxu0 0.0
        %474 = vmatpush2.msra.mxu0 0.0
        %475 = vmatprep.subr.mxu0 0.0
        %476 = vmatpush2.msra.mxu0 0.0
        %477 = vmatprep.subr.mxu0 0.0
        %478 = vmatpush2.msra.mxu0 0.0
        %479 = vmatprep.subr.mxu0 0.0
        %480 = vmatpush2.msra.mxu0 0.0
        %481 = vmatprep.mubr.f32.mxu0 0.0
        %482 = vmatmul.mubr.f32.gmra.mxu0 %v415
        %v483 = vpop.f32.mrf.mxu0
        %v484 = vadd.f32 0.0, %v483
        %v485 = vpop.f32.mrf.mxu0
        %486 = vdwg.mxu0
        %v488 = vsel %vm267, %v262, 0
        %490 = vmatprep.subr.mxu0 0.0
        %491 = vmatpush1.msra.mxu0 0.0
        %492 = vmatprep.subr.mxu0 0.0
        %493 = vmatpush1.msra.mxu0 0.0
        %494 = vmatprep.subr.mxu0 0.0
        %495 = vmatpush1.msra.mxu0 0.0
        %496 = vmatprep.subr.mxu0 0.0
        %497 = vmatpush1.msra.mxu0 0.0
        %498 = vmatprep.subr.mxu0 0.0
        %499 = vmatpush1.msra.mxu0 0.0
        %500 = vmatprep.subr.mxu0 0.0
        %501 = vmatpush1.msra.mxu0 0.0
        %502 = vmatprep.subr.mxu0 0.0
        %503 = vmatpush1.msra.mxu0 0.0
        %504 = vmatprep.subr.mxu0 0.0
        %505 = vmatpush1.msra.mxu0 0.0
        %506 = vmatprep.subr.mxu0 0.0
        %507 = vmatpush1.msra.mxu0 0.0
        %508 = vmatprep.subr.mxu0 0.0
        %509 = vmatpush1.msra.mxu0 0.0
        %510 = vmatprep.subr.mxu0 0.0
        %511 = vmatpush1.msra.mxu0 0.0
        %512 = vmatprep.subr.mxu0 0.0
        %513 = vmatpush1.msra.mxu0 0.0
        %514 = vmatprep.subr.mxu0 0.0
        %515 = vmatpush1.msra.mxu0 0.0
        %516 = vmatprep.subr.mxu0 0.0
        %517 = vmatpush1.msra.mxu0 0.0
        %518 = vmatprep.subr.mxu0 0.0
        %519 = vmatpush1.msra.mxu0 %v258
        %520 = vmatprep.subr.mxu0 0.0
        %521 = vmatpush1.msra.mxu0 %v257
        %522 = vmatprep.subr.mxu0 0.0
        %523 = vmatpush2.msra.mxu0 0.0
        %524 = vmatprep.subr.mxu0 0.0
        %525 = vmatpush2.msra.mxu0 0.0
        %526 = vmatprep.subr.mxu0 0.0
        %527 = vmatpush2.msra.mxu0 0.0
        %528 = vmatprep.subr.mxu0 0.0
        %529 = vmatpush2.msra.mxu0 0.0
        %530 = vmatprep.subr.mxu0 0.0
        %531 = vmatpush2.msra.mxu0 0.0
        %532 = vmatprep.subr.mxu0 0.0
        %533 = vmatpush2.msra.mxu0 0.0
        %534 = vmatprep.subr.mxu0 0.0
        %535 = vmatpush2.msra.mxu0 0.0
        %536 = vmatprep.subr.mxu0 0.0
        %537 = vmatpush2.msra.mxu0 0.0
        %538 = vmatprep.subr.mxu0 0.0
        %539 = vmatpush2.msra.mxu0 0.0
        %540 = vmatprep.subr.mxu0 0.0
        %541 = vmatpush2.msra.mxu0 0.0
        %542 = vmatprep.subr.mxu0 0.0
        %543 = vmatpush2.msra.mxu0 0.0
        %544 = vmatprep.subr.mxu0 0.0
        %545 = vmatpush2.msra.mxu0 0.0
        %546 = vmatprep.subr.mxu0 0.0
        %547 = vmatpush2.msra.mxu0 0.0
        %548 = vmatprep.subr.mxu0 0.0
        %549 = vmatpush2.msra.mxu0 0.0
        %550 = vmatprep.subr.mxu0 0.0
        %551 = vmatpush2.msra.mxu0 0.0
        %552 = vmatprep.subr.mxu0 0.0
        %553 = vmatpush2.msra.mxu0 0.0
        %554 = vmatprep.mubr.f32.mxu0 0.0
        %555 = vmatmul.mubr.f32.gmra.mxu0 %v488
        %v556 = vpop.f32.mrf.mxu0
        %v557 = vadd.f32 0.0, %v556
        %v558 = vpop.f32.mrf.mxu0
        %559 = vdwg.mxu0
        %v560 = vadd.f32 %v263, %v338
        %v561 = vadd.f32 %v264, %v411
        %v562 = vadd.f32 %v265, %v484
        %v563 = vadd.f32 %v266, %v557
        %564 = vst [vmem:[#allocation2] sm:$0x1] %v560
        %565 = vst [vmem:[#allocation2 + $0x1] sm:$0x1] %v561
        %566 = vst [vmem:[#allocation2 + $0x2] sm:$0x1] %v562
        %567 = vst [vmem:[#allocation2 + $0x3] sm:$0x1] %v563
        %v568 = vld [vmem:[#allocation3] sm:$0x1]
        %v569 = vld [vmem:[#allocation3 + $0x1] sm:$0x1]
        %v570 = vld [vmem:[#allocation3 + $0x2] sm:$0x1]
        %v571 = vld [vmem:[#allocation3 + $0x3] sm:$0x1]
        %vm572 = vcmask 122880
        %v573 = vsel %vm572, %v259, 0.0
        %574 = vadd.xlane.f32.xlu0 %v573
        %v575 = vpop.xlane.xlu0 %574
        %v576 = vsel %vm572, %v260, 0.0
        %577 = vadd.xlane.f32.xlu0 %v576
        %v578 = vpop.xlane.xlu0 %577
        %v579 = vsel %vm572, %v261, 0.0
        %580 = vadd.xlane.f32.xlu0 %v579
        %v581 = vpop.xlane.xlu0 %580
        %v582 = vsel %vm572, %v262, 0.0
        %583 = vadd.xlane.f32.xlu0 %v582
        %v584 = vpop.xlane.xlu0 %583
        %v585 = vadd.f32 %v568, %v575
        %v586 = vadd.f32 %v569, %v578
        %v587 = vadd.f32 %v570, %v581
        %v588 = vadd.f32 %v571, %v584
        %vm589 = vcmask 0
        %590 = vst.msk [vmem:[#allocation3] sm:$0x1] %vm589, %v585
        %591 = vst.msk [vmem:[#allocation3 + $0x1] sm:$0x1] %vm589, %v586
        %592 = vst.msk [vmem:[#allocation3 + $0x2] sm:$0x1] %vm589, %v587
        %593 = vst.msk [vmem:[#allocation3 + $0x3] sm:$0x1] %vm589, %v588
        // Predicated region
        $region41: #{tpu_custom_call.1} parent=27 // pred_check
          %p594 = pneg %p238
        $region42: #{tpu_custom_call.1} parent=27 // pred_check_branch
          %596 = sbr.rel (%p594) target = $region44
        $region43: #{tpu_custom_call.1} parent=27 // pred_region
          %v597 = vld [vmem:[#allocation3] sm:$0x1]
          %v598 = vld [vmem:[#allocation3 + $0x1] sm:$0x1]
          %v599 = vld [vmem:[#allocation3 + $0x2] sm:$0x1]
          %v600 = vld [vmem:[#allocation3 + $0x3] sm:$0x1]
          %v601 = vmax.f32 %v597, 1e-09
          %v602 = vmax.f32 %v598, 1e-09
          %v603 = vmax.f32 %v599, 1e-09
          %v604 = vmax.f32 %v600, 1e-09
          %v605 = vrcp.pop %v601
          %v606 = vmul.f32 1.0, %v605
          %v607 = vrcp.pop %v602
          %v608 = vmul.f32 1.0, %v607
          %v609 = vrcp.pop %v603
          %v610 = vmul.f32 1.0, %v609
          %v611 = vrcp.pop %v604
          %v612 = vmul.f32 1.0, %v611
          %v613 = vld [vmem:[#allocation2] sm:$0x1]
          %v614 = vld [vmem:[#allocation2 + $0x1] sm:$0x1]
          %v615 = vld [vmem:[#allocation2 + $0x2] sm:$0x1]
          %v616 = vld [vmem:[#allocation2 + $0x3] sm:$0x1]
          %618 = vset.pattern.permute.xlu0 0
          %619 = vperm.xlu0 %618, %v606
          %v620 = vpop.permute.xlu0 %619
          %v622 = vlaneseq
          %v623 = vshrl.u32 %v622, 7
          %v624 = vsub.s32 0, %v623
          %v625 = vrot.slane %v620, %v624
          %627 = vset.pattern.permute.xlu0 0
          %628 = vperm.xlu0 %627, %v608
          %v629 = vpop.permute.xlu0 %628
          %v631 = vlaneseq
          %v632 = vshrl.u32 %v631, 7
          %v633 = vsub.s32 0, %v632
          %v634 = vrot.slane %v629, %v633
          %636 = vset.pattern.permute.xlu0 0
          %637 = vperm.xlu0 %636, %v610
          %v638 = vpop.permute.xlu0 %637
          %v640 = vlaneseq
          %v641 = vshrl.u32 %v640, 7
          %v642 = vsub.s32 0, %v641
          %v643 = vrot.slane %v638, %v642
          %645 = vset.pattern.permute.xlu0 0
          %646 = vperm.xlu0 %645, %v612
          %v647 = vpop.permute.xlu0 %646
          %v649 = vlaneseq
          %v650 = vshrl.u32 %v649, 7
          %v651 = vsub.s32 0, %v650
          %v652 = vrot.slane %v647, %v651
          %v653 = vmul.f32 %v613, %v625
          %v654 = vmul.f32 %v614, %v634
          %v655 = vmul.f32 %v615, %v643
          %v656 = vmul.f32 %v616, %v652
          %657 = vst [vmem:[%s233] sm:$0x1] %v653
          %658 = vst [vmem:[%s233 + $0x1] sm:$0x1] %v654
          %659 = vst [vmem:[%s233 + $0x2] sm:$0x1] %v655
          %660 = vst [vmem:[%s233 + $0x3] sm:$0x1] %v656
        $region44: #{tpu_custom_call.1} parent=27 // pred_fallthru
          _
        %s661 = sand.u32 %s109, 1
        %s662 = scalar_lea.sflag [#allocation6], %s661
        %s663 = sand.u32 %s109, 1
        %s664 = smul.addr %s663, 4
        %s665 = scalar_lea.vmem [#allocation9], %s664
        // Predicated region
        $region45: #{tpu_custom_call.1} parent=27 // pred_check
          %p666 = pneg %p119
        $region46: #{tpu_custom_call.1} parent=27 // pred_check_branch
          %668 = sbr.rel (%p666) target = $region48
        $region47: #{tpu_custom_call.1} parent=27 // pred_region
          %s669 = smul.u32 4, %s27
          %s671 = ssub.s32 64, 64
          %672 = vsyncadd %s662, %s671
          %s673 = sadd.s32 %s28, %s669
          %s674 = smul.addr %s673, 16
          %s675 = scalar_lea.hbm %s2, %s674
          %s676 = sshll.u32 %s665, 4
          %s677 = int_to_ptr.vmem [resolvable:$true] %s676
          %682 = dma.vmem_to_hbm [thread:$0]  %s677, 64, %s675, %s662, 16, 16, 1
        $region48: #{tpu_custom_call.1} parent=27 // pred_fallthru
          _
      $region28: #{tpu_custom_call.1} parent=5 // pred_fallthru
        _
      %p683 = scmp.le.s32.totalorder 2, %s17
      // Predicated region
      $region49: #{tpu_custom_call.1} parent=5 // pred_check
        %p684 = pneg %p683
      $region50: #{tpu_custom_call.1} parent=5 // pred_check_branch
        %686 = sbr.rel (%p684) target = $region52
      $region51: #{tpu_custom_call.1} parent=5 // pred_region
        %s687 = ssub.s32 %s17, 2
        // Predicated region
        $region53: #{tpu_custom_call.1} parent=51 // pred_check
          %p688 = pneg %p125
        $region54: #{tpu_custom_call.1} parent=51 // pred_check_branch
          %690 = sbr.rel (%p688) target = $region56
        $region55: #{tpu_custom_call.1} parent=51 // pred_region
          %s691 = sand.u32 %s110, 1
          %s692 = scalar_lea.sflag [#allocation6], %s691
          %s693 = sand.u32 %s110, 1
          %s694 = smul.addr %s693, 4
          %s695 = scalar_lea.vmem [#allocation9], %s694
          %696 = dma.done %s692, 64
        $region56: #{tpu_custom_call.1} parent=51 // pred_fallthru
          _
      $region52: #{tpu_custom_call.1} parent=5 // pred_fallthru
        _
    $region6: #{tpu_custom_call.1} parent=1 // loop_footer
      %s21 = sadd.s32 1, %s17
    $region7: #{tpu_custom_call.1} parent=1 // loop_footer_branch
      %16 = sbr.rel target = $region3
    $region8: #{tpu_custom_call.1} parent=1 // loop_exit
      _
    %697 = vsyncpa [#allocation5], 1
    %s698 = scalar_lea.sflag [#allocation5], 1
    %699 = vsyncpa %s698, 1
    %700 = vsyncpa [#allocation8], 1
    %s701 = scalar_lea.sflag [#allocation8], 1
    %702 = vsyncpa %s701, 1
    %703 = vsyncpa [#allocation6], 1
    %s704 = scalar_lea.sflag [#allocation6], 1
    %705 = vsyncpa %s704, 1

</llo_original>
